<compile_context>
chip_gen: v7x
topology: tpu7x:2x2x1
jax: 0.10.0
libtpu: 0.0.40
codegen_flags: <defaults>
</compile_context>

<pallas_src>
import functools

import jax
import jax.numpy as jnp
from jax.experimental import pallas as pl
from jax.experimental.pallas import tpu as pltpu


def _make_mlp_kernel(training: bool, in_dim: int):
    """Build the fused fc1 -> relu -> dropout -> fc2 kernel body."""

    def kernel(x_ref, w1_ref, b1_ref, w2_ref, b2_ref, *rest):
        if training:
            mask_ref, o_ref = rest
        else:
            (o_ref,) = rest

        x = x_ref[...]            # [B, in_dim]
        w1 = w1_ref[...]          # [in_dim, hid]

        # fc1 on the VPU: K=in_dim (=4) unrolled broadcast multiply-adds.
        # Avoids pushing a tiny, badly underfilled tile through the MXU.
        h = b1_ref[...]           # [1, hid] -> broadcasts to [B, hid] on first add
        for k in range(in_dim):
            h = h + x[:, k:k + 1] * w1[k:k + 1, :]

        # relu
        h = jnp.maximum(h, 0.0)

        # dropout (train mode only): mask is pre-scaled {0, 1/(1-p)} from the wrapper.
        if training:
            h = h * mask_ref[...]

        # fc2: [B, hid] @ [hid, out_pad] + [1, out_pad]  (out_pad = 128, lane-dense)
        out = jnp.dot(h, w2_ref[...],
                      preferred_element_type=jnp.float32) + b2_ref[...]
        o_ref[...] = out.astype(o_ref.dtype)

    return kernel


@functools.partial(jax.jit, static_argnames=("training", "p"))
def mlp_forward(x, w1, b1, w2, b2, key=None, *, training=False, p=0.5):
    """x: [B, in_dim] f32.  w1: [in_dim, hid], b1: [hid], w2: [hid, out], b2: [out].

    In train mode, `key` must be a jax.random key (fresh per step) used to draw the
    dropout mask.
    """
    B, in_dim = x.shape
    hid = w1.shape[1]
    out_dim = w2.shape[1]

    # Lane-dense output: pad the N dimension of fc2 up to a multiple of 128.
    out_pad = ((out_dim + 127) // 128) * 128
    w2p = jnp.zeros((hid, out_pad), x.dtype).at[:, :out_dim].set(w2)
    b2p = jnp.zeros((1, out_pad), x.dtype).at[:, :out_dim].set(b2)

    kernel = _make_mlp_kernel(training, in_dim)

    vmem = pl.BlockSpec(memory_space=pltpu.MemorySpace.VMEM)
    in_specs = [vmem, vmem, vmem, vmem, vmem]   # x, w1, b1, w2p, b2p
    args = [x, w1, b1.reshape(1, -1), w2p, b2p]

    if training:
        keep = jax.random.bernoulli(key, 1.0 - p, (B, hid))
        mask = keep.astype(x.dtype) * (1.0 / (1.0 - p))
        in_specs.append(vmem)
        args.append(mask)

    out_padded = pl.pallas_call(
        kernel,
        out_shape=jax.ShapeDtypeStruct((B, out_pad), x.dtype),
        in_specs=in_specs,
        out_specs=pl.BlockSpec(memory_space=pltpu.MemorySpace.VMEM),
    )(*args)

    # Slice the real logits back out (outside the kernel; store stays lane-dense).
    return out_padded[:, :out_dim]


def init_params(key, input_dim, hidden_dim, output_dim):
    """Deterministic init matching nn.Linear's U(-1/sqrt(fan_in), 1/sqrt(fan_in))."""
    k1, k2, k3, k4 = jax.random.split(key, 4)
    bound1 = 1.0 / jnp.sqrt(input_dim)
    bound2 = 1.0 / jnp.sqrt(hidden_dim)
    # Stored already transposed relative to PyTorch ([in, out] instead of [out, in]).
    w1 = jax.random.uniform(k1, (input_dim, hidden_dim), jnp.float32, -bound1, bound1)
    b1 = jax.random.uniform(k2, (hidden_dim,), jnp.float32, -bound1, bound1)
    w2 = jax.random.uniform(k3, (hidden_dim, output_dim), jnp.float32, -bound2, bound2)
    b2 = jax.random.uniform(k4, (output_dim,), jnp.float32, -bound2, bound2)
    return w1, b1, w2, b2


if __name__ == "__main__":
    # CartPole-v1: observation dim = 4, actions = 2; hidden_dim = 128.
    input_dim, hidden_dim, output_dim = 4, 128, 2
    batch = 8

    key = jax.random.PRNGKey(0)
    kx, kp, kd = jax.random.split(key, 3)
    x = jax.random.normal(kx, (batch, input_dim), jnp.float32)
    w1, b1, w2, b2 = init_params(kp, input_dim, hidden_dim, output_dim)

    # Eval-mode forward (dropout is identity, matching model.eval() semantics).
    out = jax.block_until_ready(mlp_forward(x, w1, b1, w2, b2, training=False))
    ref = jnp.maximum(x @ w1 + b1, 0.0) @ w2 + b2
    assert out.shape == (batch, output_dim)
    assert jnp.allclose(out, ref, atol=1e-5, rtol=1e-5)

    # Train-mode forward (dropout mask drawn from the caller-provided key).
    out_train = jax.block_until_ready(
        mlp_forward(x, w1, b1, w2, b2, key=kd, training=True, p=0.5))
    keep_ref = jax.random.bernoulli(kd, 0.5, (batch, hidden_dim)).astype(jnp.float32)
    ref_train = (jnp.maximum(x @ w1 + b1, 0.0) * keep_ref * 2.0) @ w2 + b2
    assert out_train.shape == (batch, output_dim)
    assert jnp.allclose(out_train, ref_train, atol=1e-5, rtol=1e-5)

    print("KERNEL_OK")
</pallas_src>

<mosaic_0001>
module attributes {stable_mosaic.version = 11 : i64} {
  func.func @kernel(%arg0: memref<8x4xf32, #tpu.memory_space<vmem>>, %arg1: memref<4x128xf32, #tpu.memory_space<vmem>>, %arg2: memref<1x128xf32, #tpu.memory_space<vmem>>, %arg3: memref<128x128xf32, #tpu.memory_space<vmem>>, %arg4: memref<1x128xf32, #tpu.memory_space<vmem>>, %arg5: memref<8x128xf32, #tpu.memory_space<vmem>>) attributes {dimension_semantics = [], scalar_prefetch = 0 : i64, scratch_operands = 0 : i64, tpu.core_type = #tpu.core_type<tc>} {
    %c0 = arith.constant 0 : index
    %c0_0 = arith.constant 0 : index
    %0 = vector.load %arg0[%c0, %c0_0] : memref<8x4xf32, #tpu.memory_space<vmem>>, vector<8x4xf32>
    %c0_1 = arith.constant 0 : index
    %c0_2 = arith.constant 0 : index
    %1 = vector.load %arg1[%c0_1, %c0_2] : memref<4x128xf32, #tpu.memory_space<vmem>>, vector<4x128xf32>
    %c0_3 = arith.constant 0 : index
    %c0_4 = arith.constant 0 : index
    %2 = vector.load %arg2[%c0_3, %c0_4] : memref<1x128xf32, #tpu.memory_space<vmem>>, vector<1x128xf32>
    %3 = vector.extract_strided_slice %0 {offsets = [0, 0], sizes = [8, 1], strides = [1, 1]} : vector<8x4xf32> to vector<8x1xf32>
    %4 = vector.extract_strided_slice %1 {offsets = [0, 0], sizes = [1, 128], strides = [1, 1]} : vector<4x128xf32> to vector<1x128xf32>
    %5 = vector.broadcast %3 : vector<8x1xf32> to vector<8x128xf32>
    %6 = vector.broadcast %4 : vector<1x128xf32> to vector<8x128xf32>
    %7 = arith.mulf %5, %6 : vector<8x128xf32>
    %8 = vector.broadcast %2 : vector<1x128xf32> to vector<8x128xf32>
    %9 = arith.addf %8, %7 : vector<8x128xf32>
    %10 = vector.extract_strided_slice %0 {offsets = [0, 1], sizes = [8, 1], strides = [1, 1]} : vector<8x4xf32> to vector<8x1xf32>
    %11 = vector.extract_strided_slice %1 {offsets = [1, 0], sizes = [1, 128], strides = [1, 1]} : vector<4x128xf32> to vector<1x128xf32>
    %12 = vector.broadcast %10 : vector<8x1xf32> to vector<8x128xf32>
    %13 = vector.broadcast %11 : vector<1x128xf32> to vector<8x128xf32>
    %14 = arith.mulf %12, %13 : vector<8x128xf32>
    %15 = arith.addf %9, %14 : vector<8x128xf32>
    %16 = vector.extract_strided_slice %0 {offsets = [0, 2], sizes = [8, 1], strides = [1, 1]} : vector<8x4xf32> to vector<8x1xf32>
    %17 = vector.extract_strided_slice %1 {offsets = [2, 0], sizes = [1, 128], strides = [1, 1]} : vector<4x128xf32> to vector<1x128xf32>
    %18 = vector.broadcast %16 : vector<8x1xf32> to vector<8x128xf32>
    %19 = vector.broadcast %17 : vector<1x128xf32> to vector<8x128xf32>
    %20 = arith.mulf %18, %19 : vector<8x128xf32>
    %21 = arith.addf %15, %20 : vector<8x128xf32>
    %22 = vector.extract_strided_slice %0 {offsets = [0, 3], sizes = [8, 1], strides = [1, 1]} : vector<8x4xf32> to vector<8x1xf32>
    %23 = vector.extract_strided_slice %1 {offsets = [3, 0], sizes = [1, 128], strides = [1, 1]} : vector<4x128xf32> to vector<1x128xf32>
    %24 = vector.broadcast %22 : vector<8x1xf32> to vector<8x128xf32>
    %25 = vector.broadcast %23 : vector<1x128xf32> to vector<8x128xf32>
    %26 = arith.mulf %24, %25 : vector<8x128xf32>
    %27 = arith.addf %21, %26 : vector<8x128xf32>
    %cst = arith.constant 0.000000e+00 : f32
    %28 = vector.broadcast %cst : f32 to vector<8x128xf32>
    %29 = arith.maximumf %27, %28 : vector<8x128xf32>
    %c0_5 = arith.constant 0 : index
    %c0_6 = arith.constant 0 : index
    %30 = vector.load %arg3[%c0_5, %c0_6] : memref<128x128xf32, #tpu.memory_space<vmem>>, vector<128x128xf32>
    %cst_7 = arith.constant dense<0.000000e+00> : vector<8x128xf32>
    %31 = tpu.matmul %29, %30, %cst_7 {dimension_numbers = #tpu.dot_dimension_numbers<[1], [0], [0], [1], [0, 0, 1, 1], [], []>} : vector<8x128xf32>, vector<128x128xf32>, vector<8x128xf32> -> vector<8x128xf32>
    %c0_8 = arith.constant 0 : index
    %c0_9 = arith.constant 0 : index
    %32 = vector.load %arg4[%c0_8, %c0_9] : memref<1x128xf32, #tpu.memory_space<vmem>>, vector<1x128xf32>
    %33 = vector.broadcast %32 : vector<1x128xf32> to vector<8x128xf32>
    %34 = arith.addf %31, %33 : vector<8x128xf32>
    %c0_10 = arith.constant 0 : index
    %c0_11 = arith.constant 0 : index
    %35 = vector.load %arg5[%c0_10, %c0_11] : memref<8x128xf32, #tpu.memory_space<vmem>>, vector<8x128xf32>
    tpu.vector_store %arg5[%c0_10, %c0_11], %34 {strides = array<i32>} : memref<8x128xf32, #tpu.memory_space<vmem>>, vector<8x128xf32>,
    return
  }
}

</mosaic_0001>

<llo_original>
// kernel: mlp_forward.1
$region0: #{mlp_forward.1}
  #allocation0 [shape = 'u32[]', space=smem, size = 0x4, offset = 0x4, fixed_abs, tag = 'smem constant byte address 0x4 - core index']
  #allocation1 [shape = 'u32[144,128]{1,0:T(1,128)}', space=vmem, size = 0x12000, scoped, tag = 'internal scratch']
  %s0 = inlined_call_operand.vmem [shape: f32[8,4], index: 0, kind: input, shape index: {}]
  %s1 = inlined_call_operand.vmem [shape: f32[4,128], index: 1, kind: input, shape index: {}]
  %s2 = inlined_call_operand.vmem [shape: f32[1,128], index: 2, kind: input, shape index: {}]
  %s3 = inlined_call_operand.vmem [shape: f32[128,128], index: 3, kind: input, shape index: {}]
  %s4 = inlined_call_operand.vmem [shape: f32[1,128], index: 4, kind: input, shape index: {}]
  %s5 = inlined_call_operand.vmem [shape: f32[8,128], index: 5, kind: output, shape index: {}]
  %s6 = sld [smem:[#allocation0]]
  $region30: #{mlp_forward.1} parent=0
    _
  %s8 = ssub.s32 1, %s6
  %s9 = scalar_select 0, %s8, %s6
  // Predicated region
  $region2: #{mlp_forward.1} parent=0 // pred_check
    _
  $region3: #{mlp_forward.1} parent=0 // pred_check_branch
    %11 = sbr.rel (0) target = $region5
  $region4: #{mlp_forward.1} parent=0 // pred_region
    _
  $region5: #{mlp_forward.1} parent=0 // pred_fallthru
    _
  // Predicated region
  $region6: #{mlp_forward.1} parent=0 // pred_check
    _
  $region7: #{mlp_forward.1} parent=0 // pred_check_branch
    %13 = sbr.rel (0) target = $region9
  $region8: #{mlp_forward.1} parent=0 // pred_region
    _
  $region9: #{mlp_forward.1} parent=0 // pred_fallthru
    _
  // Predicated region
  $region10: #{mlp_forward.1} parent=0 // pred_check
    _
  $region11: #{mlp_forward.1} parent=0 // pred_check_branch
    %15 = sbr.rel (0) target = $region13
  $region12: #{mlp_forward.1} parent=0 // pred_region
    _
  $region13: #{mlp_forward.1} parent=0 // pred_fallthru
    _
  // Predicated region
  $region14: #{mlp_forward.1} parent=0 // pred_check
    _
  $region15: #{mlp_forward.1} parent=0 // pred_check_branch
    %17 = sbr.rel (0) target = $region17
  $region16: #{mlp_forward.1} parent=0 // pred_region
    _
  $region17: #{mlp_forward.1} parent=0 // pred_fallthru
    _
  // Predicated region
  $region18: #{mlp_forward.1} parent=0 // pred_check
    _
  $region19: #{mlp_forward.1} parent=0 // pred_check_branch
    %19 = sbr.rel (0) target = $region21
  $region20: #{mlp_forward.1} parent=0 // pred_region
    _
  $region21: #{mlp_forward.1} parent=0 // pred_fallthru
    _
  %v20 = vld [vmem:[%s0] sm:$0xff]
  %v21 = vld [vmem:[%s1] sm:$0xf]
  %v22 = vld [vmem:[%s2] sm:$0x1]
  %24 = vset.pattern.permute.xlu0 0
  %25 = vperm.xlu0 %24, %v20
  %v26 = vpop.permute.xlu0 %25
  %v28 = vlaneseq
  %v29 = vshrl.u32 %v28, 7
  %v30 = vsub.s32 0, %v29
  %v31 = vrot.slane %v21, %v30
  %v32 = vmul.f32 %v26, %v31
  %v34 = vlaneseq
  %v35 = vshrl.u32 %v34, 7
  %v36 = vsub.s32 0, %v35
  %v37 = vrot.slane %v22, %v36
  %v39 = vadd.f32 %v37, %v32
  %40 = vset.pattern.permute.xlu0 1
  %41 = vperm.xlu0 %40, %v20
  %v42 = vpop.permute.xlu0 %41
  %v44 = vlaneseq
  %v45 = vshrl.u32 %v44, 7
  %v46 = vsub.s32 1, %v45
  %v47 = vrot.slane %v21, %v46
  %v48 = vmul.f32 %v42, %v47
  %v49 = vadd.f32 %v39, %v48
  %50 = vset.pattern.permute.xlu0 2
  %51 = vperm.xlu0 %50, %v20
  %v52 = vpop.permute.xlu0 %51
  %v54 = vlaneseq
  %v55 = vshrl.u32 %v54, 7
  %v56 = vsub.s32 2, %v55
  %v57 = vrot.slane %v21, %v56
  %v58 = vmul.f32 %v52, %v57
  %v59 = vadd.f32 %v49, %v58
  %60 = vset.pattern.permute.xlu0 3
  %61 = vperm.xlu0 %60, %v20
  %v62 = vpop.permute.xlu0 %61
  %v64 = vlaneseq
  %v65 = vshrl.u32 %v64, 7
  %v66 = vsub.s32 3, %v65
  %v67 = vrot.slane %v21, %v66
  %v68 = vmul.f32 %v62, %v67
  %v69 = vadd.f32 %v59, %v68
  %v70 = vmax.f32 %v69, 0.0
  %v71 = vld [vmem:[%s3] sm:$0xff]
  %v72 = vld [vmem:[%s3 + $0x8] sm:$0xff]
  %v73 = vld [vmem:[%s3 + $0x10] sm:$0xff]
  %v74 = vld [vmem:[%s3 + $0x18] sm:$0xff]
  %v75 = vld [vmem:[%s3 + $0x20] sm:$0xff]
  %v76 = vld [vmem:[%s3 + $0x28] sm:$0xff]
  %v77 = vld [vmem:[%s3 + $0x30] sm:$0xff]
  %v78 = vld [vmem:[%s3 + $0x38] sm:$0xff]
  %v79 = vld [vmem:[%s3 + $0x40] sm:$0xff]
  %v80 = vld [vmem:[%s3 + $0x48] sm:$0xff]
  %v81 = vld [vmem:[%s3 + $0x50] sm:$0xff]
  %v82 = vld [vmem:[%s3 + $0x58] sm:$0xff]
  %v83 = vld [vmem:[%s3 + $0x60] sm:$0xff]
  %v84 = vld [vmem:[%s3 + $0x68] sm:$0xff]
  %v85 = vld [vmem:[%s3 + $0x70] sm:$0xff]
  %v86 = vld [vmem:[%s3 + $0x78] sm:$0xff]
  %v87 = vld [vmem:[%s4] sm:$0x1]
  %v89 = vlaneseq
  %v90 = vshrl.u32 %v89, 7
  %v91 = vsub.s32 0, %v90
  %v92 = vrot.slane %v87, %v91
  %94 = vmatprep.subr.mxu0 0.0
  %95 = vmatpush1.msra.mxu0 %v71
  %96 = vmatprep.subr.mxu0 0.0
  %97 = vmatpush1.msra.mxu0 %v72
  %98 = vmatprep.subr.mxu0 0.0
  %99 = vmatpush1.msra.mxu0 %v73
  %100 = vmatprep.subr.mxu0 0.0
  %101 = vmatpush1.msra.mxu0 %v74
  %102 = vmatprep.subr.mxu0 0.0
  %103 = vmatpush1.msra.mxu0 %v75
  %104 = vmatprep.subr.mxu0 0.0
  %105 = vmatpush1.msra.mxu0 %v76
  %106 = vmatprep.subr.mxu0 0.0
  %107 = vmatpush1.msra.mxu0 %v77
  %108 = vmatprep.subr.mxu0 0.0
  %109 = vmatpush1.msra.mxu0 %v78
  %110 = vmatprep.subr.mxu0 0.0
  %111 = vmatpush1.msra.mxu0 %v79
  %112 = vmatprep.subr.mxu0 0.0
  %113 = vmatpush1.msra.mxu0 %v80
  %114 = vmatprep.subr.mxu0 0.0
  %115 = vmatpush1.msra.mxu0 %v81
  %116 = vmatprep.subr.mxu0 0.0
  %117 = vmatpush1.msra.mxu0 %v82
  %118 = vmatprep.subr.mxu0 0.0
  %119 = vmatpush1.msra.mxu0 %v83
  %120 = vmatprep.subr.mxu0 0.0
  %121 = vmatpush1.msra.mxu0 %v84
  %122 = vmatprep.subr.mxu0 0.0
  %123 = vmatpush1.msra.mxu0 %v85
  %124 = vmatprep.subr.mxu0 0.0
  %125 = vmatpush1.msra.mxu0 %v86
  %126 = vmatprep.subr.mxu0 0.0
  %127 = vmatpush1.msra.mxu0 0.0
  %128 = vmatprep.subr.mxu0 0.0
  %129 = vmatpush1.msra.mxu0 0.0
  %130 = vmatprep.subr.mxu0 0.0
  %131 = vmatpush1.msra.mxu0 0.0
  %132 = vmatprep.subr.mxu0 0.0
  %133 = vmatpush1.msra.mxu0 0.0
  %134 = vmatprep.subr.mxu0 0.0
  %135 = vmatpush1.msra.mxu0 0.0
  %136 = vmatprep.subr.mxu0 0.0
  %137 = vmatpush1.msra.mxu0 0.0
  %138 = vmatprep.subr.mxu0 0.0
  %139 = vmatpush1.msra.mxu0 0.0
  %140 = vmatprep.subr.mxu0 0.0
  %141 = vmatpush1.msra.mxu0 0.0
  %142 = vmatprep.subr.mxu0 0.0
  %143 = vmatpush1.msra.mxu0 0.0
  %144 = vmatprep.subr.mxu0 0.0
  %145 = vmatpush1.msra.mxu0 0.0
  %146 = vmatprep.subr.mxu0 0.0
  %147 = vmatpush1.msra.mxu0 0.0
  %148 = vmatprep.subr.mxu0 0.0
  %149 = vmatpush1.msra.mxu0 0.0
  %150 = vmatprep.subr.mxu0 0.0
  %151 = vmatpush1.msra.mxu0 0.0
  %152 = vmatprep.subr.mxu0 0.0
  %153 = vmatpush1.msra.mxu0 0.0
  %154 = vmatprep.subr.mxu0 0.0
  %155 = vmatpush1.msra.mxu0 0.0
  %156 = vmatprep.subr.mxu0 0.0
  %157 = vmatpush1.msra.mxu0 0.0
  %158 = vmatprep.mubr.f32.mxu0 0.0
  %159 = vmatmul.mubr.f32.gmra.mrb[0].mxu0 %v70
  %v160 = vpop.f32.mrb[0].mxu0
  %v161 = vadd.f32 %v92, %v160
  %v162 = vpop.f32.mrb[0].mxu0
  %163 = vdwg.mxu0
  %164 = vst [vmem:[%s5] sm:$0xff] %v161
  // Predicated region
  $region22: #{mlp_forward.1} parent=0 // pred_check
    _
  $region23: #{mlp_forward.1} parent=0 // pred_check_branch
    %166 = sbr.rel (0) target = $region25
  $region24: #{mlp_forward.1} parent=0 // pred_region
    _
  $region25: #{mlp_forward.1} parent=0 // pred_fallthru
    _
  // Predicated region
  $region26: #{mlp_forward.1} parent=0 // pred_check
    _
  $region27: #{mlp_forward.1} parent=0 // pred_check_branch
    %168 = sbr.rel (0) target = $region29
  $region28: #{mlp_forward.1} parent=0 // pred_region
    _
  $region29: #{mlp_forward.1} parent=0 // pred_fallthru
    _

</llo_original>
